<compile_context>
chip_gen: v5e
topology: v5e:2x2
jax: 0.10.0
libtpu: 0.0.40
codegen_flags: <defaults>
</compile_context>

<pallas_src>
import functools

import jax
import jax.numpy as jnp
from jax.experimental import pallas as pl
from jax.experimental.pallas import tpu as pltpu

KH = KW = 5          # conv1 kernel size
PAD = 2              # conv1 padding
C1 = 6               # conv1 output channels (folded away)


def net_kernel(xf_ref, mask_ref, w_ref, b_ref, o_ref, xp_ref, *, W, OFFP):
    # xf_ref  : (TB, H*W)           flattened (row-major) unpadded input planes
    # mask_ref: (2*PAD+1, H*W)      column-validity masks, row kw <-> dw = kw - PAD
    # w_ref   : (KH*KW,)   SMEM     fused conv1*conv2 weights, tap = kh*KW + kw
    # b_ref   : (1,)       SMEM     fused conv2 bias
    # o_ref   : (TB, H*W)           flattened output planes
    # xp_ref  : (TB, H*W + 2*OFFP)  VMEM scratch: zero-padded flat rows
    TB, HW = o_ref.shape

    # Zero-pad each flat row in VMEM (replaces the old HBM jnp.pad pass).
    xp_ref[...] = jnp.zeros_like(xp_ref)
    xp_ref[:, OFFP:OFFP + HW] = xf_ref[...].astype(jnp.float32)   # 128-aligned store

    # 5x5 conv as 25 scalar-weighted shifted adds on the flat rows; taps that
    # share a horizontal offset dw share one column mask.
    acc = jnp.zeros((TB, HW), dtype=jnp.float32)
    for kw in range(KW):
        part = jnp.zeros((TB, HW), dtype=jnp.float32)
        for kh in range(KH):
            start = OFFP + (kh - PAD) * W + (kw - PAD)
            part = part + w_ref[kh * KW + kw] * xp_ref[:, start:start + HW]
        acc = acc + part * mask_ref[kw:kw + 1, :]

    o_ref[...] = (acc + b_ref[0]).astype(o_ref.dtype)


def _pick_block_batch(N, HW):
    """Images per grid step: whole batch if tiny, else a multiple of 8 sized for
    ~1 MiB blocks while keeping >= 2 (parallel) grid steps."""
    if N <= 8:
        return N
    row_bytes = HW * 4
    tb = min(N // 2, max(8, (1 << 20) // row_bytes))
    tb = max(8, tb - tb % 8)
    return min(tb, N)


def net_forward(x_nchw, w1, w2, b2):
    """x_nchw: (N, 1, H, W).  w1: (6,1,5,5), w2: (1,6,1,1), b2: (1,)."""
    N, C, H, W = x_nchw.shape
    assert C == 1 and W >= 2
    HW = H * W
    OFFP = ((2 * W + 2 + 127) // 128) * 128       # 128-aligned zero pad per side

    # Glue (plain JAX): free reshapes + tiny weight fold.
    x_flat = x_nchw.reshape(N, HW).astype(jnp.float32)
    w_eff = jnp.tensordot(w2[0, :, 0, 0], w1[:, 0], axes=1)     # (5, 5) fused weights
    w_flat = w_eff.reshape(KH * KW).astype(jnp.float32)         # (25,)
    b2 = b2.reshape(1).astype(jnp.float32)

    # Column masks: masks[kw, p] = 1 iff column (p % W) + (kw - PAD) is in range.
    col = jnp.tile(jnp.arange(W, dtype=jnp.int32), H)           # (HW,)
    dw = jnp.arange(-PAD, PAD + 1, dtype=jnp.int32)[:, None]    # (5, 1)
    masks = ((col[None, :] + dw >= 0) &
             (col[None, :] + dw < W)).astype(jnp.float32)       # (5, HW)

    TB = _pick_block_batch(N, HW)
    grid = (pl.cdiv(N, TB),)

    out_flat = pl.pallas_call(
        functools.partial(net_kernel, W=W, OFFP=OFFP),
        out_shape=jax.ShapeDtypeStruct((N, HW), jnp.float32),
        grid_spec=pltpu.PrefetchScalarGridSpec(
            num_scalar_prefetch=0,
            grid=grid,
            in_specs=[
                pl.BlockSpec((TB, HW), lambda n: (n, 0)),
                pl.BlockSpec((2 * PAD + 1, HW), lambda n: (0, 0)),
                pl.BlockSpec(memory_space=pltpu.SMEM),
                pl.BlockSpec(memory_space=pltpu.SMEM),
            ],
            out_specs=pl.BlockSpec((TB, HW), lambda n: (n, 0)),
            scratch_shapes=[pltpu.VMEM((TB, HW + 2 * OFFP), jnp.float32)],
        ),
        compiler_params=pltpu.CompilerParams(
            dimension_semantics=("parallel",)),
    )(x_flat, masks, w_flat, b2)

    return out_flat.reshape(N, 1, H, W)


def _reference(x_nchw, w1, w2, b2):
    y = jax.lax.conv_general_dilated(
        x_nchw, w1, window_strides=(1, 1), padding=((PAD, PAD), (PAD, PAD)),
        dimension_numbers=("NCHW", "OIHW", "NCHW"))
    y = jax.lax.conv_general_dilated(
        y, w2, window_strides=(1, 1), padding="VALID",
        dimension_numbers=("NCHW", "OIHW", "NCHW"))
    return y + b2.reshape(1, 1, 1, 1)


if __name__ == "__main__":
    key = jax.random.PRNGKey(0)
    k_x, k_w1, k_w2, k_b2 = jax.random.split(key, 4)

    # Deterministic synthetic parameters (shapes from Net.__init__).
    w1 = jax.random.normal(k_w1, (C1, 1, KH, KW), dtype=jnp.float32) * 0.2   # conv1 weight
    w2 = jax.random.normal(k_w2, (1, C1, 1, 1), dtype=jnp.float32) * 0.4     # conv2 weight
    b2 = jax.random.normal(k_b2, (1,), dtype=jnp.float32) * 0.1              # conv2 bias

    x = jax.random.normal(k_x, (2, 1, 16, 16), dtype=jnp.float32)

    out = net_forward(x, w1, w2, b2)
    out = jax.block_until_ready(out)

    ref = _reference(x, w1, w2, b2)
    assert out.shape == (2, 1, 16, 16)
    assert jnp.allclose(out, ref, atol=1e-4, rtol=1e-4), \
        float(jnp.max(jnp.abs(out - ref)))

    print("KERNEL_OK")
</pallas_src>

<mosaic_0001>
module attributes {stable_mosaic.version = 11 : i64} {
  func.func @net_kernel(%arg0: i32, %arg1: memref<2x256xf32, #tpu.memory_space<vmem>>, %arg2: memref<5x256xf32, #tpu.memory_space<vmem>>, %arg3: memref<25xf32, #tpu.memory_space<smem>>, %arg4: memref<1xf32, #tpu.memory_space<smem>>, %arg5: memref<2x256xf32, #tpu.memory_space<vmem>>, %arg6: memref<2x512xf32, #tpu.memory_space<vmem>>) attributes {dimension_semantics = [#tpu.dimension_semantics<parallel>], iteration_bounds = array<i64: 1>, scalar_prefetch = 0 : i64, scratch_operands = 1 : i64, tpu.core_type = #tpu.core_type<tc>, window_params = [{transform_indices = @transform_0, window_bounds = array<i64: 2, 256>}, {pipeline_mode = #tpu.pipeline_mode<synchronous>, transform_indices = @transform_1, window_bounds = array<i64: 5, 256>}, {transform_indices = @transform_2, window_bounds = array<i64: 25>}, {transform_indices = @transform_3, window_bounds = array<i64: 1>}, {transform_indices = @transform_4, window_bounds = array<i64: 2, 256>}]} {
    %cst = arith.constant 0.000000e+00 : f32
    %0 = vector.broadcast %cst : f32 to vector<2x512xf32>
    %c0 = arith.constant 0 : index
    %c0_0 = arith.constant 0 : index
    %1 = vector.load %arg6[%c0, %c0_0] : memref<2x512xf32, #tpu.memory_space<vmem>>, vector<2x512xf32>
    tpu.vector_store %arg6[%c0, %c0_0], %0 {strides = array<i32>} : memref<2x512xf32, #tpu.memory_space<vmem>>, vector<2x512xf32>,
    %c0_1 = arith.constant 0 : index
    %c0_2 = arith.constant 0 : index
    %2 = vector.load %arg1[%c0_1, %c0_2] : memref<2x256xf32, #tpu.memory_space<vmem>>, vector<2x256xf32>
    %c0_3 = arith.constant 0 : index
    %c128 = arith.constant 128 : index
    %3 = vector.load %arg6[%c0_3, %c128] : memref<2x512xf32, #tpu.memory_space<vmem>>, vector<2x256xf32>
    tpu.vector_store %arg6[%c0_3, %c128], %2 {strides = array<i32>} : memref<2x512xf32, #tpu.memory_space<vmem>>, vector<2x256xf32>,
    %cst_4 = arith.constant 0.000000e+00 : f32
    %4 = vector.broadcast %cst_4 : f32 to vector<2x256xf32>
    %cst_5 = arith.constant 0.000000e+00 : f32
    %5 = vector.broadcast %cst_5 : f32 to vector<2x256xf32>
    %c0_6 = arith.constant 0 : index
    %6 = memref.load %arg3[%c0_6] : memref<25xf32, #tpu.memory_space<smem>>
    %c0_7 = arith.constant 0 : index
    %c94 = arith.constant 94 : index
    %7 = vector.load %arg6[%c0_7, %c94] : memref<2x512xf32, #tpu.memory_space<vmem>>, vector<2x256xf32>
    %8 = vector.broadcast %6 : f32 to vector<2x256xf32>
    %9 = arith.mulf %8, %7 : vector<2x256xf32>
    %10 = arith.addf %5, %9 : vector<2x256xf32>
    %c5 = arith.constant 5 : index
    %11 = memref.load %arg3[%c5] : memref<25xf32, #tpu.memory_space<smem>>
    %c0_8 = arith.constant 0 : index
    %c110 = arith.constant 110 : index
    %12 = vector.load %arg6[%c0_8, %c110] : memref<2x512xf32, #tpu.memory_space<vmem>>, vector<2x256xf32>
    %13 = vector.broadcast %11 : f32 to vector<2x256xf32>
    %14 = arith.mulf %13, %12 : vector<2x256xf32>
    %15 = arith.addf %10, %14 : vector<2x256xf32>
    %c10 = arith.constant 10 : index
    %16 = memref.load %arg3[%c10] : memref<25xf32, #tpu.memory_space<smem>>
    %c0_9 = arith.constant 0 : index
    %c126 = arith.constant 126 : index
    %17 = vector.load %arg6[%c0_9, %c126] : memref<2x512xf32, #tpu.memory_space<vmem>>, vector<2x256xf32>
    %18 = vector.broadcast %16 : f32 to vector<2x256xf32>
    %19 = arith.mulf %18, %17 : vector<2x256xf32>
    %20 = arith.addf %15, %19 : vector<2x256xf32>
    %c15 = arith.constant 15 : index
    %21 = memref.load %arg3[%c15] : memref<25xf32, #tpu.memory_space<smem>>
    %c0_10 = arith.constant 0 : index
    %c142 = arith.constant 142 : index
    %22 = vector.load %arg6[%c0_10, %c142] : memref<2x512xf32, #tpu.memory_space<vmem>>, vector<2x256xf32>
    %23 = vector.broadcast %21 : f32 to vector<2x256xf32>
    %24 = arith.mulf %23, %22 : vector<2x256xf32>
    %25 = arith.addf %20, %24 : vector<2x256xf32>
    %c20 = arith.constant 20 : index
    %26 = memref.load %arg3[%c20] : memref<25xf32, #tpu.memory_space<smem>>
    %c0_11 = arith.constant 0 : index
    %c158 = arith.constant 158 : index
    %27 = vector.load %arg6[%c0_11, %c158] : memref<2x512xf32, #tpu.memory_space<vmem>>, vector<2x256xf32>
    %28 = vector.broadcast %26 : f32 to vector<2x256xf32>
    %29 = arith.mulf %28, %27 : vector<2x256xf32>
    %30 = arith.addf %25, %29 : vector<2x256xf32>
    %c0_12 = arith.constant 0 : index
    %c0_13 = arith.constant 0 : index
    %31 = vector.load %arg2[%c0_12, %c0_13] : memref<5x256xf32, #tpu.memory_space<vmem>>, vector<1x256xf32>
    %32 = vector.broadcast %31 : vector<1x256xf32> to vector<2x256xf32>
    %33 = arith.mulf %30, %32 : vector<2x256xf32>
    %34 = arith.addf %4, %33 : vector<2x256xf32>
    %cst_14 = arith.constant 0.000000e+00 : f32
    %35 = vector.broadcast %cst_14 : f32 to vector<2x256xf32>
    %c1 = arith.constant 1 : index
    %36 = memref.load %arg3[%c1] : memref<25xf32, #tpu.memory_space<smem>>
    %c0_15 = arith.constant 0 : index
    %c95 = arith.constant 95 : index
    %37 = vector.load %arg6[%c0_15, %c95] : memref<2x512xf32, #tpu.memory_space<vmem>>, vector<2x256xf32>
    %38 = vector.broadcast %36 : f32 to vector<2x256xf32>
    %39 = arith.mulf %38, %37 : vector<2x256xf32>
    %40 = arith.addf %35, %39 : vector<2x256xf32>
    %c6 = arith.constant 6 : index
    %41 = memref.load %arg3[%c6] : memref<25xf32, #tpu.memory_space<smem>>
    %c0_16 = arith.constant 0 : index
    %c111 = arith.constant 111 : index
    %42 = vector.load %arg6[%c0_16, %c111] : memref<2x512xf32, #tpu.memory_space<vmem>>, vector<2x256xf32>
    %43 = vector.broadcast %41 : f32 to vector<2x256xf32>
    %44 = arith.mulf %43, %42 : vector<2x256xf32>
    %45 = arith.addf %40, %44 : vector<2x256xf32>
    %c11 = arith.constant 11 : index
    %46 = memref.load %arg3[%c11] : memref<25xf32, #tpu.memory_space<smem>>
    %c0_17 = arith.constant 0 : index
    %c127 = arith.constant 127 : index
    %47 = vector.load %arg6[%c0_17, %c127] : memref<2x512xf32, #tpu.memory_space<vmem>>, vector<2x256xf32>
    %48 = vector.broadcast %46 : f32 to vector<2x256xf32>
    %49 = arith.mulf %48, %47 : vector<2x256xf32>
    %50 = arith.addf %45, %49 : vector<2x256xf32>
    %c16 = arith.constant 16 : index
    %51 = memref.load %arg3[%c16] : memref<25xf32, #tpu.memory_space<smem>>
    %c0_18 = arith.constant 0 : index
    %c143 = arith.constant 143 : index
    %52 = vector.load %arg6[%c0_18, %c143] : memref<2x512xf32, #tpu.memory_space<vmem>>, vector<2x256xf32>
    %53 = vector.broadcast %51 : f32 to vector<2x256xf32>
    %54 = arith.mulf %53, %52 : vector<2x256xf32>
    %55 = arith.addf %50, %54 : vector<2x256xf32>
    %c21 = arith.constant 21 : index
    %56 = memref.load %arg3[%c21] : memref<25xf32, #tpu.memory_space<smem>>
    %c0_19 = arith.constant 0 : index
    %c159 = arith.constant 159 : index
    %57 = vector.load %arg6[%c0_19, %c159] : memref<2x512xf32, #tpu.memory_space<vmem>>, vector<2x256xf32>
    %58 = vector.broadcast %56 : f32 to vector<2x256xf32>
    %59 = arith.mulf %58, %57 : vector<2x256xf32>
    %60 = arith.addf %55, %59 : vector<2x256xf32>
    %c1_20 = arith.constant 1 : index
    %c0_21 = arith.constant 0 : index
    %61 = vector.load %arg2[%c1_20, %c0_21] : memref<5x256xf32, #tpu.memory_space<vmem>>, vector<1x256xf32>
    %62 = vector.broadcast %61 : vector<1x256xf32> to vector<2x256xf32>
    %63 = arith.mulf %60, %62 : vector<2x256xf32>
    %64 = arith.addf %34, %63 : vector<2x256xf32>
    %cst_22 = arith.constant 0.000000e+00 : f32
    %65 = vector.broadcast %cst_22 : f32 to vector<2x256xf32>
    %c2 = arith.constant 2 : index
    %66 = memref.load %arg3[%c2] : memref<25xf32, #tpu.memory_space<smem>>
    %c0_23 = arith.constant 0 : index
    %c96 = arith.constant 96 : index
    %67 = vector.load %arg6[%c0_23, %c96] : memref<2x512xf32, #tpu.memory_space<vmem>>, vector<2x256xf32>
    %68 = vector.broadcast %66 : f32 to vector<2x256xf32>
    %69 = arith.mulf %68, %67 : vector<2x256xf32>
    %70 = arith.addf %65, %69 : vector<2x256xf32>
    %c7 = arith.constant 7 : index
    %71 = memref.load %arg3[%c7] : memref<25xf32, #tpu.memory_space<smem>>
    %c0_24 = arith.constant 0 : index
    %c112 = arith.constant 112 : index
    %72 = vector.load %arg6[%c0_24, %c112] : memref<2x512xf32, #tpu.memory_space<vmem>>, vector<2x256xf32>
    %73 = vector.broadcast %71 : f32 to vector<2x256xf32>
    %74 = arith.mulf %73, %72 : vector<2x256xf32>
    %75 = arith.addf %70, %74 : vector<2x256xf32>
    %c12 = arith.constant 12 : index
    %76 = memref.load %arg3[%c12] : memref<25xf32, #tpu.memory_space<smem>>
    %c0_25 = arith.constant 0 : index
    %c128_26 = arith.constant 128 : index
    %77 = vector.load %arg6[%c0_25, %c128_26] : memref<2x512xf32, #tpu.memory_space<vmem>>, vector<2x256xf32>
    %78 = vector.broadcast %76 : f32 to vector<2x256xf32>
    %79 = arith.mulf %78, %77 : vector<2x256xf32>
    %80 = arith.addf %75, %79 : vector<2x256xf32>
    %c17 = arith.constant 17 : index
    %81 = memref.load %arg3[%c17] : memref<25xf32, #tpu.memory_space<smem>>
    %c0_27 = arith.constant 0 : index
    %c144 = arith.constant 144 : index
    %82 = vector.load %arg6[%c0_27, %c144] : memref<2x512xf32, #tpu.memory_space<vmem>>, vector<2x256xf32>
    %83 = vector.broadcast %81 : f32 to vector<2x256xf32>
    %84 = arith.mulf %83, %82 : vector<2x256xf32>
    %85 = arith.addf %80, %84 : vector<2x256xf32>
    %c22 = arith.constant 22 : index
    %86 = memref.load %arg3[%c22] : memref<25xf32, #tpu.memory_space<smem>>
    %c0_28 = arith.constant 0 : index
    %c160 = arith.constant 160 : index
    %87 = vector.load %arg6[%c0_28, %c160] : memref<2x512xf32, #tpu.memory_space<vmem>>, vector<2x256xf32>
    %88 = vector.broadcast %86 : f32 to vector<2x256xf32>
    %89 = arith.mulf %88, %87 : vector<2x256xf32>
    %90 = arith.addf %85, %89 : vector<2x256xf32>
    %c2_29 = arith.constant 2 : index
    %c0_30 = arith.constant 0 : index
    %91 = vector.load %arg2[%c2_29, %c0_30] : memref<5x256xf32, #tpu.memory_space<vmem>>, vector<1x256xf32>
    %92 = vector.broadcast %91 : vector<1x256xf32> to vector<2x256xf32>
    %93 = arith.mulf %90, %92 : vector<2x256xf32>
    %94 = arith.addf %64, %93 : vector<2x256xf32>
    %cst_31 = arith.constant 0.000000e+00 : f32
    %95 = vector.broadcast %cst_31 : f32 to vector<2x256xf32>
    %c3 = arith.constant 3 : index
    %96 = memref.load %arg3[%c3] : memref<25xf32, #tpu.memory_space<smem>>
    %c0_32 = arith.constant 0 : index
    %c97 = arith.constant 97 : index
    %97 = vector.load %arg6[%c0_32, %c97] : memref<2x512xf32, #tpu.memory_space<vmem>>, vector<2x256xf32>
    %98 = vector.broadcast %96 : f32 to vector<2x256xf32>
    %99 = arith.mulf %98, %97 : vector<2x256xf32>
    %100 = arith.addf %95, %99 : vector<2x256xf32>
    %c8 = arith.constant 8 : index
    %101 = memref.load %arg3[%c8] : memref<25xf32, #tpu.memory_space<smem>>
    %c0_33 = arith.constant 0 : index
    %c113 = arith.constant 113 : index
    %102 = vector.load %arg6[%c0_33, %c113] : memref<2x512xf32, #tpu.memory_space<vmem>>, vector<2x256xf32>
    %103 = vector.broadcast %101 : f32 to vector<2x256xf32>
    %104 = arith.mulf %103, %102 : vector<2x256xf32>
    %105 = arith.addf %100, %104 : vector<2x256xf32>
    %c13 = arith.constant 13 : index
    %106 = memref.load %arg3[%c13] : memref<25xf32, #tpu.memory_space<smem>>
    %c0_34 = arith.constant 0 : index
    %c129 = arith.constant 129 : index
    %107 = vector.load %arg6[%c0_34, %c129] : memref<2x512xf32, #tpu.memory_space<vmem>>, vector<2x256xf32>
    %108 = vector.broadcast %106 : f32 to vector<2x256xf32>
    %109 = arith.mulf %108, %107 : vector<2x256xf32>
    %110 = arith.addf %105, %109 : vector<2x256xf32>
    %c18 = arith.constant 18 : index
    %111 = memref.load %arg3[%c18] : memref<25xf32, #tpu.memory_space<smem>>
    %c0_35 = arith.constant 0 : index
    %c145 = arith.constant 145 : index
    %112 = vector.load %arg6[%c0_35, %c145] : memref<2x512xf32, #tpu.memory_space<vmem>>, vector<2x256xf32>
    %113 = vector.broadcast %111 : f32 to vector<2x256xf32>
    %114 = arith.mulf %113, %112 : vector<2x256xf32>
    %115 = arith.addf %110, %114 : vector<2x256xf32>
    %c23 = arith.constant 23 : index
    %116 = memref.load %arg3[%c23] : memref<25xf32, #tpu.memory_space<smem>>
    %c0_36 = arith.constant 0 : index
    %c161 = arith.constant 161 : index
    %117 = vector.load %arg6[%c0_36, %c161] : memref<2x512xf32, #tpu.memory_space<vmem>>, vector<2x256xf32>
    %118 = vector.broadcast %116 : f32 to vector<2x256xf32>
    %119 = arith.mulf %118, %117 : vector<2x256xf32>
    %120 = arith.addf %115, %119 : vector<2x256xf32>
    %c3_37 = arith.constant 3 : index
    %c0_38 = arith.constant 0 : index
    %121 = vector.load %arg2[%c3_37, %c0_38] : memref<5x256xf32, #tpu.memory_space<vmem>>, vector<1x256xf32>
    %122 = vector.broadcast %121 : vector<1x256xf32> to vector<2x256xf32>
    %123 = arith.mulf %120, %122 : vector<2x256xf32>
    %124 = arith.addf %94, %123 : vector<2x256xf32>
    %cst_39 = arith.constant 0.000000e+00 : f32
    %125 = vector.broadcast %cst_39 : f32 to vector<2x256xf32>
    %c4 = arith.constant 4 : index
    %126 = memref.load %arg3[%c4] : memref<25xf32, #tpu.memory_space<smem>>
    %c0_40 = arith.constant 0 : index
    %c98 = arith.constant 98 : index
    %127 = vector.load %arg6[%c0_40, %c98] : memref<2x512xf32, #tpu.memory_space<vmem>>, vector<2x256xf32>
    %128 = vector.broadcast %126 : f32 to vector<2x256xf32>
    %129 = arith.mulf %128, %127 : vector<2x256xf32>
    %130 = arith.addf %125, %129 : vector<2x256xf32>
    %c9 = arith.constant 9 : index
    %131 = memref.load %arg3[%c9] : memref<25xf32, #tpu.memory_space<smem>>
    %c0_41 = arith.constant 0 : index
    %c114 = arith.constant 114 : index
    %132 = vector.load %arg6[%c0_41, %c114] : memref<2x512xf32, #tpu.memory_space<vmem>>, vector<2x256xf32>
    %133 = vector.broadcast %131 : f32 to vector<2x256xf32>
    %134 = arith.mulf %133, %132 : vector<2x256xf32>
    %135 = arith.addf %130, %134 : vector<2x256xf32>
    %c14 = arith.constant 14 : index
    %136 = memref.load %arg3[%c14] : memref<25xf32, #tpu.memory_space<smem>>
    %c0_42 = arith.constant 0 : index
    %c130 = arith.constant 130 : index
    %137 = vector.load %arg6[%c0_42, %c130] : memref<2x512xf32, #tpu.memory_space<vmem>>, vector<2x256xf32>
    %138 = vector.broadcast %136 : f32 to vector<2x256xf32>
    %139 = arith.mulf %138, %137 : vector<2x256xf32>
    %140 = arith.addf %135, %139 : vector<2x256xf32>
    %c19 = arith.constant 19 : index
    %141 = memref.load %arg3[%c19] : memref<25xf32, #tpu.memory_space<smem>>
    %c0_43 = arith.constant 0 : index
    %c146 = arith.constant 146 : index
    %142 = vector.load %arg6[%c0_43, %c146] : memref<2x512xf32, #tpu.memory_space<vmem>>, vector<2x256xf32>
    %143 = vector.broadcast %141 : f32 to vector<2x256xf32>
    %144 = arith.mulf %143, %142 : vector<2x256xf32>
    %145 = arith.addf %140, %144 : vector<2x256xf32>
    %c24 = arith.constant 24 : index
    %146 = memref.load %arg3[%c24] : memref<25xf32, #tpu.memory_space<smem>>
    %c0_44 = arith.constant 0 : index
    %c162 = arith.constant 162 : index
    %147 = vector.load %arg6[%c0_44, %c162] : memref<2x512xf32, #tpu.memory_space<vmem>>, vector<2x256xf32>
    %148 = vector.broadcast %146 : f32 to vector<2x256xf32>
    %149 = arith.mulf %148, %147 : vector<2x256xf32>
    %150 = arith.addf %145, %149 : vector<2x256xf32>
    %c4_45 = arith.constant 4 : index
    %c0_46 = arith.constant 0 : index
    %151 = vector.load %arg2[%c4_45, %c0_46] : memref<5x256xf32, #tpu.memory_space<vmem>>, vector<1x256xf32>
    %152 = vector.broadcast %151 : vector<1x256xf32> to vector<2x256xf32>
    %153 = arith.mulf %150, %152 : vector<2x256xf32>
    %154 = arith.addf %124, %153 : vector<2x256xf32>
    %c0_47 = arith.constant 0 : index
    %155 = memref.load %arg4[%c0_47] : memref<1xf32, #tpu.memory_space<smem>>
    %156 = vector.broadcast %155 : f32 to vector<2x256xf32>
    %157 = arith.addf %154, %156 : vector<2x256xf32>
    %c0_48 = arith.constant 0 : index
    %c0_49 = arith.constant 0 : index
    %158 = vector.load %arg5[%c0_48, %c0_49] : memref<2x256xf32, #tpu.memory_space<vmem>>, vector<2x256xf32>
    tpu.vector_store %arg5[%c0_48, %c0_49], %157 {strides = array<i32>} : memref<2x256xf32, #tpu.memory_space<vmem>>, vector<2x256xf32>,
    return
  }
  func.func @transform_0(%arg0: i32) -> (i32, i32) {
    %c0_i32 = arith.constant 0 : i32
    %c0_i32_0 = arith.constant 0 : i32
    return %arg0, %c0_i32 : i32, i32
  }
  func.func @transform_1(%arg0: i32) -> (i32, i32) {
    %c0_i32 = arith.constant 0 : i32
    %c0_i32_0 = arith.constant 0 : i32
    %c0_i32_1 = arith.constant 0 : i32
    return %c0_i32, %c0_i32_0 : i32, i32
  }
  func.func @transform_2(%arg0: i32) -> i32 {
    %c0_i32 = arith.constant 0 : i32
    %c0_i32_0 = arith.constant 0 : i32
    return %c0_i32 : i32
  }
  func.func @transform_3(%arg0: i32) -> i32 {
    %c0_i32 = arith.constant 0 : i32
    %c0_i32_0 = arith.constant 0 : i32
    return %c0_i32 : i32
  }
  func.func @transform_4(%arg0: i32) -> (i32, i32) {
    %c0_i32 = arith.constant 0 : i32
    %c0_i32_0 = arith.constant 0 : i32
    return %arg0, %c0_i32 : i32, i32
  }
}

</mosaic_0001>

<llo_original>
// kernel: tpu_custom_call.1
$region0: #{tpu_custom_call.1}
  #allocation0 [shape = 'u32[]', space=smem, size = 0x4, offset = 0x4, fixed_abs, tag = 'smem constant byte address 0x4 - core index']
  #allocation1 [shape = 'u32[72,128]{1,0:T(1,128)}', space=vmem, size = 0x9000, scoped, tag = 'internal scratch']
  #allocation2 [shape = 'f32[2,512]{1,0:T(2,128)}', space=vmem, size = 0x1000, scoped, tag = 'scratch operand']
  #allocation3 [shape = 'f32[1]{0:T(128)S(6)}', space=smem, size = 0x200, scoped, tag = 'scoped memory for tpu_custom_call.1']
  %s0 = inlined_call_operand.hbm [shape: f32[2,256], index: 0, kind: input, shape index: {}]
  %s1 = inlined_call_operand.hbm [shape: f32[5,256], index: 1, kind: input, shape index: {}]
  %s2 = inlined_call_operand.vmem [shape: f32[25], index: 2, kind: input, shape index: {}]
  %s3 = inlined_call_operand.<no memory space> [shape: f32[1], index: 3, kind: input, shape index: {}]
  %s4 = inlined_call_operand.hbm [shape: f32[2,256], index: 4, kind: output, shape index: {}]
  %s5 = sld [smem:[#allocation0]]
  $region38: #{tpu_custom_call.1} parent=0
    _
  %s7 = ssub.s32 1, %s5
  %s8 = scalar_select 0, %s7, %s5
  %9 = sst [smem:[#allocation3]] %s3
  $region1: #{tpu_custom_call.1} parent=0
    #allocation4 [shape = 'u8[2048]{0}', space=vmem, size = 0x800, scoped, tag = 'input window, operand 0, single buffered']
    #allocation5 [shape = 's32[1]{0}', space=sflag, size = 0x4, scoped, tag = 'scoped memory for tpu_custom_call.1']
    #allocation6 [shape = 's32[1]{0}', space=sflag, size = 0x4, scoped, tag = 'scoped memory for tpu_custom_call.1']
    #allocation7 [shape = 's32[1]{0}', space=sflag, size = 0x4, scoped, tag = 'scoped memory for tpu_custom_call.1']
    #allocation8 [shape = 'u8[8192]{0}', space=vmem, size = 0x2000, scoped, tag = 'input window, operand 1, single buffered']
    #allocation9 [shape = 's32[1]{0}', space=sflag, size = 0x4, scoped, tag = 'scoped memory for tpu_custom_call.1']
    #allocation10 [shape = 'u8[512]{0}', space=smem, size = 0x200, scoped, tag = 'input window, operand 2, single buffered']
    #allocation11 [shape = 'u8[2048]{0}', space=vmem, size = 0x800, scoped, tag = 'output window, operand 0, single buffered']
    %10 = vsyncpa [#allocation5], 0
    %11 = vsyncpa [#allocation9], 0
    %12 = vsyncpa [#allocation7], 0
    %13 = vsyncpa [#allocation6], 0
    // Predicated region
    $region2: #{tpu_custom_call.1} parent=1 // pred_check
      _
    $region3: #{tpu_custom_call.1} parent=1 // pred_check_branch
      %15 = sbr.rel (0) target = $region5
    $region4: #{tpu_custom_call.1} parent=1 // pred_region
      %17 = vsyncadd [#allocation5], 0
      %s19 = sshll.u32 %s0, 4
      %s20 = int_to_ptr.hbm [resolvable:$true] %s19
      %s21 = sshll.u32 [#allocation4], 4
      %s22 = int_to_ptr.vmem [resolvable:$true] %s21
      %24 = dma.hbm_to_vmem [thread:$0]  %s20, 64, %s22, [#allocation5]
    $region5: #{tpu_custom_call.1} parent=1 // pred_fallthru
      _
    // Predicated region
    $region6: #{tpu_custom_call.1} parent=1 // pred_check
      _
    $region7: #{tpu_custom_call.1} parent=1 // pred_check_branch
      %26 = sbr.rel (0) target = $region9
    $region8: #{tpu_custom_call.1} parent=1 // pred_region
      %28 = vsyncadd [#allocation9], 0
      %s30 = sshll.u32 %s1, 4
      %s31 = int_to_ptr.hbm [resolvable:$true] %s30
      %s32 = sshll.u32 [#allocation8], 4
      %s33 = int_to_ptr.vmem [resolvable:$true] %s32
      %35 = dma.hbm_to_vmem [thread:$0]  %s31, 256, %s33, [#allocation9]
    $region9: #{tpu_custom_call.1} parent=1 // pred_fallthru
      _
    // Predicated region
    $region10: #{tpu_custom_call.1} parent=1 // pred_check
      _
    $region11: #{tpu_custom_call.1} parent=1 // pred_check_branch
      %37 = sbr.rel (0) target = $region13
    $region12: #{tpu_custom_call.1} parent=1 // pred_region
      %39 = vsyncadd [#allocation7], 0
      %s41 = sshll.u32 %s2, 4
      %s42 = int_to_ptr.vmem [resolvable:$true] %s41
      %44 = dma.vmem_to_smem %s42, 16, [#allocation10], [#allocation7]
    $region13: #{tpu_custom_call.1} parent=1 // pred_fallthru
      _
    // Predicated region
    $region14: #{tpu_custom_call.1} parent=1 // pred_check
      _
    $region15: #{tpu_custom_call.1} parent=1 // pred_check_branch
      %46 = sbr.rel (0) target = $region17
    $region16: #{tpu_custom_call.1} parent=1 // pred_region
      _
    $region17: #{tpu_custom_call.1} parent=1 // pred_fallthru
      _
    // Predicated region
    $region18: #{tpu_custom_call.1} parent=1 // pred_check
      _
    $region19: #{tpu_custom_call.1} parent=1 // pred_check_branch
      %48 = sbr.rel (0) target = $region21
    $region20: #{tpu_custom_call.1} parent=1 // pred_region
      %50 = dma.done [#allocation5], 64
    $region21: #{tpu_custom_call.1} parent=1 // pred_fallthru
      _
    // Predicated region
    $region22: #{tpu_custom_call.1} parent=1 // pred_check
      _
    $region23: #{tpu_custom_call.1} parent=1 // pred_check_branch
      %52 = sbr.rel (0) target = $region25
    $region24: #{tpu_custom_call.1} parent=1 // pred_region
      %54 = dma.done [#allocation9], 256
    $region25: #{tpu_custom_call.1} parent=1 // pred_fallthru
      _
    // Predicated region
    $region26: #{tpu_custom_call.1} parent=1 // pred_check
      _
    $region27: #{tpu_custom_call.1} parent=1 // pred_check_branch
      %56 = sbr.rel (0) target = $region29
    $region28: #{tpu_custom_call.1} parent=1 // pred_region
      %58 = dma.done [#allocation7], 16
    $region29: #{tpu_custom_call.1} parent=1 // pred_fallthru
      _
    %59 = sfence
    %60 = vst [vmem:[#allocation2] sm:$0xff] 0.0
    %v61 = vld [vmem:[#allocation4] sm:$0xf]
    %62 = vst [vmem:[#allocation2 + $0x2] sm:$0xf] %v61
    %s63 = sld [smem:[#allocation10]]
    %v64 = vld [vmem:[#allocation2] sm:$0x3f]
    %v65 = vstv %s63
    %v66 = vmul.f32 %v65, %v64
    %v67 = vadd.f32 %v66, 0.0
    %s68 = sld [smem:[#allocation10 + $0x5]]
    %v69 = vstv %s68
    %v70 = vmul.f32 %v69, %v64
    %72 = vrot.lane.b32.xlu0 %v70, 112
    %v73 = vpop.permute.xlu0 %72
    %v74 = vrot.slane %v73, 2
    %vm75 = vcmask 916480
    %v76 = vsel %vm75, %v73, %v74
    %v78 = vadd.f32 %v67, %v76
    %s79 = sld [smem:[#allocation10 + $0xa]]
    %v80 = vstv %s79
    %v81 = vmul.f32 %v80, %v64
    %83 = vrot.lane.b32.xlu0 %v81, 96
    %v84 = vpop.permute.xlu0 %83
    %v85 = vrot.slane %v84, 2
    %vm86 = vcmask 785408
    %v87 = vsel %vm86, %v84, %v85
    %v89 = vadd.f32 %v78, %v87
    %s90 = sld [smem:[#allocation10 + $0xf]]
    %v91 = vld [vmem:[#allocation2 + $0x2] sm:$0x3f]
    %v92 = vstv %s90
    %v93 = vmul.f32 %v92, %v91
    %95 = vrot.lane.b32.xlu0 %v93, 80
    %v96 = vpop.permute.xlu0 %95
    %v97 = vrot.slane %v96, 6
    %vm98 = vcmask 654336
    %v99 = vsel %vm98, %v97, %v96
    %v101 = vadd.f32 %v89, %v99
    %s102 = sld [smem:[#allocation10 + $0x14]]
    %v103 = vstv %s102
    %v104 = vmul.f32 %v103, %v91
    %106 = vrot.lane.b32.xlu0 %v104, 64
    %v107 = vpop.permute.xlu0 %106
    %v108 = vrot.slane %v107, 6
    %vm109 = vcmask 523264
    %v110 = vsel %vm109, %v108, %v107
    %v112 = vadd.f32 %v101, %v110
    %v113 = vld [vmem:[#allocation8] ss:$8 sm:$0x3]
    %v115 = vperm.slane %v113, 0
    %v116 = vperm.slane %v113, 1
    %v117 = vrot.slane %v116, 6
    %vm118 = vcmask 1041408
    %v119 = vsel %vm118, %v115, %v117
    %120 = vrot.lane.b32.xlu0 %v119, 94
    %v121 = vpop.permute.xlu0 %120
    %v122 = vrot.slane %v121, 6
    %vm123 = vcmask 769024
    %v124 = vsel %vm123, %v122, %v121
    %v126 = vmul.f32 %v112, %v124
    %v127 = vadd.f32 %v126, 0.0
    %s128 = sld [smem:[#allocation10 + $0x1]]
    %v129 = vstv %s128
    %v130 = vmul.f32 %v129, %v64
    %v131 = vadd.f32 %v130, 0.0
    %s132 = sld [smem:[#allocation10 + $0x6]]
    %v133 = vstv %s132
    %v134 = vmul.f32 %v133, %v64
    %136 = vrot.lane.b32.xlu0 %v134, 112
    %v137 = vpop.permute.xlu0 %136
    %v138 = vrot.slane %v137, 2
    %v139 = vsel %vm75, %v137, %v138
    %v141 = vadd.f32 %v131, %v139
    %s142 = sld [smem:[#allocation10 + $0xb]]
    %v143 = vstv %s142
    %v144 = vmul.f32 %v143, %v64
    %146 = vrot.lane.b32.xlu0 %v144, 96
    %v147 = vpop.permute.xlu0 %146
    %v148 = vrot.slane %v147, 2
    %v149 = vsel %vm86, %v147, %v148
    %v151 = vadd.f32 %v141, %v149
    %s152 = sld [smem:[#allocation10 + $0x10]]
    %v153 = vstv %s152
    %v154 = vmul.f32 %v153, %v91
    %156 = vrot.lane.b32.xlu0 %v154, 80
    %v157 = vpop.permute.xlu0 %156
    %v158 = vrot.slane %v157, 6
    %v159 = vsel %vm98, %v158, %v157
    %v161 = vadd.f32 %v151, %v159
    %s162 = sld [smem:[#allocation10 + $0x15]]
    %v163 = vstv %s162
    %v164 = vmul.f32 %v163, %v91
    %166 = vrot.lane.b32.xlu0 %v164, 64
    %v167 = vpop.permute.xlu0 %166
    %v168 = vrot.slane %v167, 6
    %v169 = vsel %vm109, %v168, %v167
    %v171 = vadd.f32 %v161, %v169
    %s172 = scalar_lea.vmem [#allocation8], 1
    %v173 = vld [vmem:[%s172] ss:$8 sm:$0x3]
    %v175 = vperm.slane %v173, 0
    %v176 = vperm.slane %v173, 1
    %v177 = vrot.slane %v176, 6
    %v178 = vsel %vm118, %v175, %v177
    %179 = vrot.lane.b32.xlu0 %v178, 95
    %v180 = vpop.permute.xlu0 %179
    %v181 = vrot.slane %v180, 6
    %vm182 = vcmask 777216
    %v183 = vsel %vm182, %v181, %v180
    %v185 = vmul.f32 %v171, %v183
    %187 = vrot.lane.b32.xlu0 %v185, 127
    %v188 = vpop.permute.xlu0 %187
    %v189 = vrot.slane %v188, 2
    %vm190 = vcmask 1039360
    %v191 = vsel %vm190, %v188, %v189
    %v193 = vadd.f32 %v127, %v191
    %s194 = sld [smem:[#allocation10 + $0x2]]
    %v195 = vstv %s194
    %v196 = vmul.f32 %v195, %v64
    %v197 = vadd.f32 %v196, 0.0
    %s198 = sld [smem:[#allocation10 + $0x7]]
    %v199 = vstv %s198
    %v200 = vmul.f32 %v199, %v64
    %202 = vrot.lane.b32.xlu0 %v200, 112
    %v203 = vpop.permute.xlu0 %202
    %v204 = vrot.slane %v203, 2
    %v205 = vsel %vm75, %v203, %v204
    %v207 = vadd.f32 %v197, %v205
    %s208 = sld [smem:[#allocation10 + $0xc]]
    %v209 = vld [vmem:[#allocation2 + $0x2] sm:$0xf]
    %v210 = vstv %s208
    %v211 = vmul.f32 %v210, %v209
    %213 = vrot.lane.b32.xlu0 %v211, 96
    %v214 = vpop.permute.xlu0 %213
    %v215 = vrot.slane %v214, 6
    %v216 = vsel %vm86, %v215, %v214
    %v218 = vadd.f32 %v207, %v216
    %s219 = sld [smem:[#allocation10 + $0x11]]
    %v220 = vstv %s219
    %v221 = vmul.f32 %v220, %v91
    %223 = vrot.lane.b32.xlu0 %v221, 80
    %v224 = vpop.permute.xlu0 %223
    %v225 = vrot.slane %v224, 6
    %v226 = vsel %vm98, %v225, %v224
    %v228 = vadd.f32 %v218, %v226
    %s229 = sld [smem:[#allocation10 + $0x16]]
    %v230 = vstv %s229
    %v231 = vmul.f32 %v230, %v91
    %233 = vrot.lane.b32.xlu0 %v231, 64
    %v234 = vpop.permute.xlu0 %233
    %v235 = vrot.slane %v234, 6
    %v236 = vsel %vm109, %v235, %v234
    %v238 = vadd.f32 %v228, %v236
    %s239 = scalar_lea.vmem [#allocation8], 2
    %v240 = vld [vmem:[%s239] ss:$8 sm:$0x3]
    %v242 = vperm.slane %v240, 0
    %v243 = vperm.slane %v240, 1
    %v244 = vrot.slane %v243, 6
    %v245 = vsel %vm118, %v242, %v244
    %246 = vrot.lane.b32.xlu0 %v245, 96
    %v247 = vpop.permute.xlu0 %246
    %v248 = vrot.slane %v247, 6
    %v249 = vsel %vm86, %v248, %v247
    %v251 = vmul.f32 %v238, %v249
    %253 = vrot.lane.b32.xlu0 %v251, 126
    %v254 = vpop.permute.xlu0 %253
    %v255 = vrot.slane %v254, 2
    %vm256 = vcmask 1031168
    %v257 = vsel %vm256, %v254, %v255
    %v259 = vadd.f32 %v193, %v257
    %s260 = sld [smem:[#allocation10 + $0x3]]
    %v261 = vstv %s260
    %v262 = vmul.f32 %v261, %v64
    %v263 = vadd.f32 %v262, 0.0
    %s264 = sld [smem:[#allocation10 + $0x8]]
    %v265 = vstv %s264
    %v266 = vmul.f32 %v265, %v64
    %268 = vrot.lane.b32.xlu0 %v266, 112
    %v269 = vpop.permute.xlu0 %268
    %v270 = vrot.slane %v269, 2
    %v271 = vsel %vm75, %v269, %v270
    %v273 = vadd.f32 %v263, %v271
    %s274 = sld [smem:[#allocation10 + $0xd]]
    %v275 = vstv %s274
    %v276 = vmul.f32 %v275, %v91
    %278 = vrot.lane.b32.xlu0 %v276, 96
    %v279 = vpop.permute.xlu0 %278
    %v280 = vrot.slane %v279, 6
    %v281 = vsel %vm86, %v280, %v279
    %v283 = vadd.f32 %v273, %v281
    %s284 = sld [smem:[#allocation10 + $0x12]]
    %v285 = vstv %s284
    %v286 = vmul.f32 %v285, %v91
    %288 = vrot.lane.b32.xlu0 %v286, 80
    %v289 = vpop.permute.xlu0 %288
    %v290 = vrot.slane %v289, 6
    %v291 = vsel %vm98, %v290, %v289
    %v293 = vadd.f32 %v283, %v291
    %s294 = sld [smem:[#allocation10 + $0x17]]
    %v295 = vstv %s294
    %v296 = vmul.f32 %v295, %v91
    %298 = vrot.lane.b32.xlu0 %v296, 64
    %v299 = vpop.permute.xlu0 %298
    %v300 = vrot.slane %v299, 6
    %v301 = vsel %vm109, %v300, %v299
    %v303 = vadd.f32 %v293, %v301
    %s304 = scalar_lea.vmem [#allocation8], 3
    %v305 = vld [vmem:[%s304] ss:$8 sm:$0x3]
    %v307 = vperm.slane %v305, 0
    %v308 = vperm.slane %v305, 1
    %v309 = vrot.slane %v308, 6
    %v310 = vsel %vm118, %v307, %v309
    %311 = vrot.lane.b32.xlu0 %v310, 97
    %v312 = vpop.permute.xlu0 %311
    %v313 = vrot.slane %v312, 6
    %vm314 = vcmask 793600
    %v315 = vsel %vm314, %v313, %v312
    %v317 = vmul.f32 %v303, %v315
    %319 = vrot.lane.b32.xlu0 %v317, 125
    %v320 = vpop.permute.xlu0 %319
    %v321 = vrot.slane %v320, 2
    %vm322 = vcmask 1022976
    %v323 = vsel %vm322, %v320, %v321
    %v325 = vadd.f32 %v259, %v323
    %s326 = sld [smem:[#allocation10 + $0x4]]
    %v327 = vstv %s326
    %v328 = vmul.f32 %v327, %v64
    %v329 = vadd.f32 %v328, 0.0
    %s330 = sld [smem:[#allocation10 + $0x9]]
    %v331 = vstv %s330
    %v332 = vmul.f32 %v331, %v64
    %334 = vrot.lane.b32.xlu0 %v332, 112
    %v335 = vpop.permute.xlu0 %334
    %v336 = vrot.slane %v335, 2
    %v337 = vsel %vm75, %v335, %v336
    %v339 = vadd.f32 %v329, %v337
    %s340 = sld [smem:[#allocation10 + $0xe]]
    %v341 = vstv %s340
    %v342 = vmul.f32 %v341, %v91
    %344 = vrot.lane.b32.xlu0 %v342, 96
    %v345 = vpop.permute.xlu0 %344
    %v346 = vrot.slane %v345, 6
    %v347 = vsel %vm86, %v346, %v345
    %v349 = vadd.f32 %v339, %v347
    %s350 = sld [smem:[#allocation10 + $0x13]]
    %v351 = vstv %s350
    %v352 = vmul.f32 %v351, %v91
    %354 = vrot.lane.b32.xlu0 %v352, 80
    %v355 = vpop.permute.xlu0 %354
    %v356 = vrot.slane %v355, 6
    %v357 = vsel %vm98, %v356, %v355
    %v359 = vadd.f32 %v349, %v357
    %s360 = sld [smem:[#allocation10 + $0x18]]
    %v361 = vstv %s360
    %v362 = vmul.f32 %v361, %v91
    %364 = vrot.lane.b32.xlu0 %v362, 64
    %v365 = vpop.permute.xlu0 %364
    %v366 = vrot.slane %v365, 6
    %v367 = vsel %vm109, %v366, %v365
    %v369 = vadd.f32 %v359, %v367
    %s370 = scalar_lea.vmem [#allocation8], 4
    %v371 = vld [vmem:[%s370] ss:$8 sm:$0x3]
    %v373 = vperm.slane %v371, 0
    %v374 = vperm.slane %v371, 1
    %v375 = vrot.slane %v374, 6
    %v376 = vsel %vm118, %v373, %v375
    %377 = vrot.lane.b32.xlu0 %v376, 98
    %v378 = vpop.permute.xlu0 %377
    %v379 = vrot.slane %v378, 6
    %vm380 = vcmask 801792
    %v381 = vsel %vm380, %v379, %v378
    %v383 = vmul.f32 %v369, %v381
    %385 = vrot.lane.b32.xlu0 %v383, 124
    %v386 = vpop.permute.xlu0 %385
    %v387 = vrot.slane %v386, 2
    %vm388 = vcmask 1014784
    %v389 = vsel %vm388, %v386, %v387
    %v391 = vadd.f32 %v325, %v389
    %s392 = sld [smem:[#allocation3]]
    %v393 = vstv %s392
    %v394 = vadd.f32 %v391, %v393
    %396 = vrot.lane.b32.xlu0 %v394, 34
    %v397 = vpop.permute.xlu0 %396
    %v398 = vrot.slane %v397, 2
    %vm399 = vcmask 277504
    %v400 = vsel %vm399, %v397, %v398
    %402 = vst [vmem:[#allocation11] sm:$0xf] %v400
    // Predicated region
    $region30: #{tpu_custom_call.1} parent=1 // pred_check
      _
    $region31: #{tpu_custom_call.1} parent=1 // pred_check_branch
      %404 = sbr.rel (0) target = $region33
    $region32: #{tpu_custom_call.1} parent=1 // pred_region
      %406 = vsyncadd [#allocation6], 0
      %s408 = sshll.u32 [#allocation11], 4
      %s409 = int_to_ptr.vmem [resolvable:$true] %s408
      %s410 = sshll.u32 %s4, 4
      %s411 = int_to_ptr.hbm [resolvable:$true] %s410
      %413 = dma.vmem_to_hbm [thread:$0]  %s409, 64, %s411, [#allocation6]
    $region33: #{tpu_custom_call.1} parent=1 // pred_fallthru
      _
    // Predicated region
    $region34: #{tpu_custom_call.1} parent=1 // pred_check
      _
    $region35: #{tpu_custom_call.1} parent=1 // pred_check_branch
      %415 = sbr.rel (0) target = $region37
    $region36: #{tpu_custom_call.1} parent=1 // pred_region
      %417 = dma.done [#allocation6], 64
    $region37: #{tpu_custom_call.1} parent=1 // pred_fallthru
      _
    %418 = vsyncpa [#allocation5], 1
    %419 = vsyncpa [#allocation9], 1
    %420 = vsyncpa [#allocation6], 1
    %421 = vsyncpa [#allocation7], 1

</llo_original>
